<compile_context>
chip_gen: v7x
topology: tpu7x:2x2x1
jax: 0.10.0
libtpu: 0.0.40
codegen_flags: <defaults>
</compile_context>

<pallas_src>
import functools

import jax
import jax.numpy as jnp
from jax import lax
from jax.experimental import pallas as pl
from jax.experimental.pallas import tpu as pltpu

# Entity tables up to this size are kept VMEM-resident and gathered with a
# one-hot matmul; larger ones use the HBM row-gather path.  Kept modest so the
# one-hot construction cost stays bounded and scoped VMEM is never stressed.
_ENT_RESIDENT_BYTES = 512 * 1024


def _sublane_pack(dtype):
    """Rows per packed (sublane x 128-lane) tile for this dtype."""
    return {4: 8, 2: 16, 1: 32}.get(jnp.dtype(dtype).itemsize, 8)


# ---------------------------------------------------------------------------
# Path A: both tables VMEM-resident; gather via one-hot matmuls on the MXU.
# ---------------------------------------------------------------------------
def _transe_resident_kernel(head_ref, rel_ref, ent_ref, relt_ref, out_ref):
    tb = out_ref.shape[0]
    num_e = ent_ref.shape[0]
    num_r = relt_ref.shape[0]

    h = head_ref[...]  # (tb, 1) int32
    r = rel_ref[...]   # (tb, 1) int32

    h_onehot = (h == lax.broadcasted_iota(jnp.int32, (tb, num_e), 1)
                ).astype(ent_ref.dtype)
    r_onehot = (r == lax.broadcasted_iota(jnp.int32, (tb, num_r), 1)
                ).astype(relt_ref.dtype)

    head_emb = jnp.dot(h_onehot, ent_ref[...], preferred_element_type=jnp.float32)
    rel_emb = jnp.dot(r_onehot, relt_ref[...], preferred_element_type=jnp.float32)
    out_ref[...] = (head_emb + rel_emb).astype(out_ref.dtype)


# ---------------------------------------------------------------------------
# Path B: entity table in HBM; double-buffered per-row DMA gather.
# ---------------------------------------------------------------------------
def _transe_hbm_kernel(head_sm, rel_ref, ent_hbm, relt_ref, out_ref,
                       ent_buf, sems, *, sub):
    tb, _ = out_ref.shape
    nsub = tb // sub
    num_r = relt_ref.shape[0]
    base = pl.program_id(0) * tb

    def issue(chunk, slot):
        # Start the `sub` single-row gathers of sub-chunk `chunk` into buffer
        # slot `slot`; all are issued before any wait so they overlap.
        for j in range(sub):
            h = head_sm[base + chunk * sub + j]
            pltpu.make_async_copy(
                ent_hbm.at[pl.ds(h, 1), :],
                ent_buf.at[pl.ds(slot * sub + j, 1), :],
                sems.at[slot, j],
            ).start()

    # Prime slot 0; those DMAs fly while the MXU does the relation gather.
    issue(0, 0)

    # Whole-tile relation gather (one-hot matmul), written straight into the
    # output block; entity rows are accumulated on top sub-chunk by sub-chunk.
    r = rel_ref[...]  # (tb, 1) int32
    r_onehot = (r == lax.broadcasted_iota(jnp.int32, (tb, num_r), 1)
                ).astype(relt_ref.dtype)
    out_ref[...] = jnp.dot(r_onehot, relt_ref[...],
                           preferred_element_type=jnp.float32).astype(out_ref.dtype)

    @pl.loop(0, nsub)
    def _(s):
        slot = s % 2

        # Prefetch sub-chunk s+1 into the other slot *before* waiting on this
        # one, so its row DMAs overlap the wait + add + store below.
        @pl.when(s + 1 < nsub)
        def _():
            issue(s + 1, 1 - slot)

        # Wait for this sub-chunk's rows (wait only needs the sem + shape).
        for j in range(sub):
            pltpu.make_async_copy(
                ent_hbm.at[pl.ds(0, 1), :],
                ent_buf.at[pl.ds(slot * sub + j, 1), :],
                sems.at[slot, j],
            ).wait()

        off = pl.multiple_of(s * sub, sub)
        rows = ent_buf[pl.ds(pl.multiple_of(slot * sub, sub), sub), :]
        out_ref[pl.ds(off, sub), :] = (
            out_ref[pl.ds(off, sub), :].astype(jnp.float32)
            + rows.astype(jnp.float32)
        ).astype(out_ref.dtype)


# ---------------------------------------------------------------------------
# Wrapper
# ---------------------------------------------------------------------------
def transe_forward(head, relation, entity_emb, relation_emb, *,
                   block_rows=None, force_hbm_gather=False):
    """entity_emb[head] + relation_emb[relation]  (TransE.forward)."""
    B = head.shape[0]
    num_e, D = entity_emb.shape
    num_r, D2 = relation_emb.shape
    assert D == D2, "entity / relation embedding dims must match"
    out_dtype = jnp.result_type(entity_emb.dtype, relation_emb.dtype)

    # NOTE: semantic divergence from PyTorch (which raises on out-of-range
    # indices): TPU has no runtime bounds check, so we clamp instead.
    head = jnp.clip(head.astype(jnp.int32), 0, num_e - 1)
    relation = jnp.clip(relation.astype(jnp.int32), 0, num_r - 1)

    sub = _sublane_pack(entity_emb.dtype)  # gather sub-chunk / packing rows
    ent_bytes = num_e * D * jnp.dtype(entity_emb.dtype).itemsize
    resident = (not force_hbm_gather) and ent_bytes <= _ENT_RESIDENT_BYTES
    # TODO(synk): a relation table too large for VMEM would need the same HBM
    # row-gather treatment as the entity table; in practice it is tiny.

    if block_rows is None:
        block_rows = 256 if resident else 128
    ceil_b = -(-B // sub) * sub
    tb = max(sub, min(-(-block_rows // sub) * sub, ceil_b))

    b_pad = -(-B // tb) * tb
    if b_pad != B:
        pad = b_pad - B
        head = jnp.concatenate([head, jnp.zeros((pad,), jnp.int32)])
        relation = jnp.concatenate([relation, jnp.zeros((pad,), jnp.int32)])

    grid = (b_pad // tb,)
    rel2d = relation.reshape(b_pad, 1)

    if resident:
        head2d = head.reshape(b_pad, 1)
        grid_spec = pltpu.PrefetchScalarGridSpec(
            num_scalar_prefetch=0,
            grid=grid,
            in_specs=[
                pl.BlockSpec((tb, 1), lambda i: (i, 0)),       # head ids
                pl.BlockSpec((tb, 1), lambda i: (i, 0)),       # relation ids
                pl.BlockSpec((num_e, D), lambda i: (0, 0)),    # entity table (VMEM resident)
                pl.BlockSpec((num_r, D), lambda i: (0, 0)),    # relation table (VMEM resident)
            ],
            out_specs=pl.BlockSpec((tb, D), lambda i: (i, 0)),
        )
        out = pl.pallas_call(
            _transe_resident_kernel,
            out_shape=jax.ShapeDtypeStruct((b_pad, D), out_dtype),
            grid_spec=grid_spec,
            compiler_params=pltpu.CompilerParams(
                dimension_semantics=("parallel",)),
        )(head2d, rel2d, entity_emb, relation_emb)
    else:
        grid_spec = pltpu.PrefetchScalarGridSpec(
            num_scalar_prefetch=1,                              # head ids -> SMEM
            grid=grid,
            in_specs=[
                pl.BlockSpec((tb, 1), lambda i, hs: (i, 0)),    # relation ids
                pl.BlockSpec(memory_space=pl.ANY),              # entity table stays in HBM
                pl.BlockSpec((num_r, D), lambda i, hs: (0, 0)),  # relation table (VMEM resident)
            ],
            out_specs=pl.BlockSpec((tb, D), lambda i, hs: (i, 0)),
            scratch_shapes=[
                pltpu.VMEM((2 * sub, D), entity_emb.dtype),     # double-buffered row gather
                pltpu.SemaphoreType.DMA((2, sub)),              # per-slot, per-row sems
            ],
        )
        out = pl.pallas_call(
            functools.partial(_transe_hbm_kernel, sub=sub),
            out_shape=jax.ShapeDtypeStruct((b_pad, D), out_dtype),
            grid_spec=grid_spec,
            compiler_params=pltpu.CompilerParams(
                dimension_semantics=("parallel",)),
        )(head, rel2d, entity_emb, relation_emb)

    return out[:B]


def xavier_uniform(key, shape, dtype=jnp.float32):
    # nn.init.xavier_uniform_ for a (fan_out, fan_in) weight: U(-a, a),
    # a = sqrt(6 / (fan_in + fan_out))
    fan_out, fan_in = shape
    a = (6.0 / (fan_in + fan_out)) ** 0.5
    return jax.random.uniform(key, shape, dtype=dtype, minval=-a, maxval=a)


if __name__ == "__main__":
    num_entities, num_relations, embedding_dim = 32, 8, 128

    root = jax.random.PRNGKey(0)
    k_ent, k_rel, k_h, k_r = jax.random.split(root, 4)

    # deterministic "module parameters" (xavier-uniform, as in __init__)
    entity_emb = xavier_uniform(k_ent, (num_entities, embedding_dim))
    relation_emb = xavier_uniform(k_rel, (num_relations, embedding_dim))

    # --- small module-sized batch: VMEM-resident-table path -----------------
    batch = 8
    head = jax.random.randint(k_h, (batch,), 0, num_entities, dtype=jnp.int32)
    relation = jax.random.randint(k_r, (batch,), 0, num_relations, dtype=jnp.int32)

    out = jax.block_until_ready(
        transe_forward(head, relation, entity_emb, relation_emb))
    ref = entity_emb[head] + relation_emb[relation]
    assert out.shape == (batch, embedding_dim)
    assert jnp.allclose(out, ref, atol=1e-6), "resident path mismatch"

    # --- larger ragged batch: exercise grid>1 and both gather paths ---------
    batch2 = 300
    k_h2, k_r2 = jax.random.split(jax.random.PRNGKey(1), 2)
    head2 = jax.random.randint(k_h2, (batch2,), 0, num_entities, dtype=jnp.int32)
    relation2 = jax.random.randint(k_r2, (batch2,), 0, num_relations, dtype=jnp.int32)
    ref2 = entity_emb[head2] + relation_emb[relation2]

    out2 = jax.block_until_ready(
        transe_forward(head2, relation2, entity_emb, relation_emb, block_rows=128))
    assert jnp.allclose(out2, ref2, atol=1e-6), "resident path (grid>1) mismatch"

    out3 = jax.block_until_ready(
        transe_forward(head2, relation2, entity_emb, relation_emb,
                       force_hbm_gather=True, block_rows=64))
    assert jnp.allclose(out3, ref2, atol=1e-6), "HBM double-buffered gather mismatch"

    print("KERNEL_OK")
</pallas_src>

<mosaic_0001>
module attributes {stable_mosaic.version = 11 : i64} {
  func.func @_transe_resident_kernel(%arg0: i32, %arg1: memref<8x1xi32, #tpu.memory_space<vmem>>, %arg2: memref<8x1xi32, #tpu.memory_space<vmem>>, %arg3: memref<32x128xf32, #tpu.memory_space<vmem>>, %arg4: memref<8x128xf32, #tpu.memory_space<vmem>>, %arg5: memref<8x128xf32, #tpu.memory_space<vmem>>) attributes {dimension_semantics = [#tpu.dimension_semantics<parallel>], iteration_bounds = array<i64: 1>, scalar_prefetch = 0 : i64, scratch_operands = 0 : i64, tpu.core_type = #tpu.core_type<tc>, window_params = [{transform_indices = @transform_0, window_bounds = array<i64: 8, 1>}, {transform_indices = @transform_1, window_bounds = array<i64: 8, 1>}, {pipeline_mode = #tpu.pipeline_mode<synchronous>, transform_indices = @transform_2, window_bounds = array<i64: 32, 128>}, {pipeline_mode = #tpu.pipeline_mode<synchronous>, transform_indices = @transform_3, window_bounds = array<i64: 8, 128>}, {transform_indices = @transform_4, window_bounds = array<i64: 8, 128>}]} {
    %c0 = arith.constant 0 : index
    %c0_0 = arith.constant 0 : index
    %0 = vector.load %arg1[%c0, %c0_0] : memref<8x1xi32, #tpu.memory_space<vmem>>, vector<8x1xi32>
    %c0_1 = arith.constant 0 : index
    %c0_2 = arith.constant 0 : index
    %1 = vector.load %arg2[%c0_1, %c0_2] : memref<8x1xi32, #tpu.memory_space<vmem>>, vector<8x1xi32>
    %2 = tpu.iota {dimensions = array<i32: 1>} : vector<8x32xi32>
    %3 = vector.broadcast %0 : vector<8x1xi32> to vector<8x32xi32>
    %4 = arith.cmpi eq, %3, %2 : vector<8x32xi32>
    %5 = arith.extui %4 : vector<8x32xi1> to vector<8x32xi32>
    %6 = arith.sitofp %5 : vector<8x32xi32> to vector<8x32xf32>
    %7 = tpu.iota {dimensions = array<i32: 1>} : vector<8x8xi32>
    %8 = vector.broadcast %1 : vector<8x1xi32> to vector<8x8xi32>
    %9 = arith.cmpi eq, %8, %7 : vector<8x8xi32>
    %10 = arith.extui %9 : vector<8x8xi1> to vector<8x8xi32>
    %11 = arith.sitofp %10 : vector<8x8xi32> to vector<8x8xf32>
    %c0_3 = arith.constant 0 : index
    %c0_4 = arith.constant 0 : index
    %12 = vector.load %arg3[%c0_3, %c0_4] : memref<32x128xf32, #tpu.memory_space<vmem>>, vector<32x128xf32>
    %cst = arith.constant dense<0.000000e+00> : vector<8x128xf32>
    %13 = tpu.matmul %6, %12, %cst {dimension_numbers = #tpu.dot_dimension_numbers<[1], [0], [0], [1], [0, 0, 1, 1], [], []>} : vector<8x32xf32>, vector<32x128xf32>, vector<8x128xf32> -> vector<8x128xf32>
    %c0_5 = arith.constant 0 : index
    %c0_6 = arith.constant 0 : index
    %14 = vector.load %arg4[%c0_5, %c0_6] : memref<8x128xf32, #tpu.memory_space<vmem>>, vector<8x128xf32>
    %cst_7 = arith.constant dense<0.000000e+00> : vector<8x128xf32>
    %15 = tpu.matmul %11, %14, %cst_7 {dimension_numbers = #tpu.dot_dimension_numbers<[1], [0], [0], [1], [0, 0, 1, 1], [], []>} : vector<8x8xf32>, vector<8x128xf32>, vector<8x128xf32> -> vector<8x128xf32>
    %16 = arith.addf %13, %15 : vector<8x128xf32>
    %c0_8 = arith.constant 0 : index
    %c0_9 = arith.constant 0 : index
    %17 = vector.load %arg5[%c0_8, %c0_9] : memref<8x128xf32, #tpu.memory_space<vmem>>, vector<8x128xf32>
    tpu.vector_store %arg5[%c0_8, %c0_9], %16 {strides = array<i32>} : memref<8x128xf32, #tpu.memory_space<vmem>>, vector<8x128xf32>,
    return
  }
  func.func @transform_0(%arg0: i32) -> (i32, i32) {
    %c0_i32 = arith.constant 0 : i32
    %c0_i32_0 = arith.constant 0 : i32
    return %arg0, %c0_i32 : i32, i32
  }
  func.func @transform_1(%arg0: i32) -> (i32, i32) {
    %c0_i32 = arith.constant 0 : i32
    %c0_i32_0 = arith.constant 0 : i32
    return %arg0, %c0_i32 : i32, i32
  }
  func.func @transform_2(%arg0: i32) -> (i32, i32) {
    %c0_i32 = arith.constant 0 : i32
    %c0_i32_0 = arith.constant 0 : i32
    %c0_i32_1 = arith.constant 0 : i32
    return %c0_i32, %c0_i32_0 : i32, i32
  }
  func.func @transform_3(%arg0: i32) -> (i32, i32) {
    %c0_i32 = arith.constant 0 : i32
    %c0_i32_0 = arith.constant 0 : i32
    %c0_i32_1 = arith.constant 0 : i32
    return %c0_i32, %c0_i32_0 : i32, i32
  }
  func.func @transform_4(%arg0: i32) -> (i32, i32) {
    %c0_i32 = arith.constant 0 : i32
    %c0_i32_0 = arith.constant 0 : i32
    return %arg0, %c0_i32 : i32, i32
  }
}

</mosaic_0001>

<llo_original>
// kernel: tpu_custom_call.1
$region0: #{tpu_custom_call.1}
  #allocation0 [shape = 'u32[]', space=smem, size = 0x4, offset = 0x4, fixed_abs, tag = 'smem constant byte address 0x4 - core index']
  #allocation1 [shape = 'u32[144,128]{1,0:T(1,128)}', space=vmem, size = 0x12000, scoped, tag = 'internal scratch']
  %s0 = inlined_call_operand.vmem [shape: s32[8,1], index: 0, kind: input, shape index: {}]
  %s1 = inlined_call_operand.vmem [shape: s32[8,1], index: 1, kind: input, shape index: {}]
  %s2 = inlined_call_operand.hbm [shape: f32[32,128], index: 2, kind: input, shape index: {}]
  %s3 = inlined_call_operand.vmem [shape: f32[8,128], index: 3, kind: input, shape index: {}]
  %s4 = inlined_call_operand.hbm [shape: f32[8,128], index: 4, kind: output, shape index: {}]
  %s5 = sld [smem:[#allocation0]]
  $region30: #{tpu_custom_call.1} parent=0
    _
  %s7 = ssub.s32 1, %s5
  %s8 = scalar_select 0, %s7, %s5
  $region1: #{tpu_custom_call.1} parent=0
    #allocation2 [shape = 'u8[16384]{0}', space=vmem, size = 0x4000, scoped, tag = 'input window, operand 2, single buffered']
    #allocation3 [shape = 's32[1]{0}', space=sflag, size = 0x4, scoped, tag = 'scoped memory for tpu_custom_call.1']
    #allocation4 [shape = 's32[1]{0}', space=sflag, size = 0x4, scoped, tag = 'scoped memory for tpu_custom_call.1']
    #allocation5 [shape = 'u8[4096]{0}', space=vmem, size = 0x1000, scoped, tag = 'output window, operand 0, single buffered']
    %9 = vsyncpa [#allocation3], 0
    %10 = vsyncpa [#allocation4], 0
    // Predicated region
    $region2: #{tpu_custom_call.1} parent=1 // pred_check
      _
    $region3: #{tpu_custom_call.1} parent=1 // pred_check_branch
      %12 = sbr.rel (0) target = $region5
    $region4: #{tpu_custom_call.1} parent=1 // pred_region
      _
    $region5: #{tpu_custom_call.1} parent=1 // pred_fallthru
      _
    // Predicated region
    $region6: #{tpu_custom_call.1} parent=1 // pred_check
      _
    $region7: #{tpu_custom_call.1} parent=1 // pred_check_branch
      %14 = sbr.rel (0) target = $region9
    $region8: #{tpu_custom_call.1} parent=1 // pred_region
      _
    $region9: #{tpu_custom_call.1} parent=1 // pred_fallthru
      _
    // Predicated region
    $region10: #{tpu_custom_call.1} parent=1 // pred_check
      _
    $region11: #{tpu_custom_call.1} parent=1 // pred_check_branch
      %16 = sbr.rel (0) target = $region13
    $region12: #{tpu_custom_call.1} parent=1 // pred_region
      %s18 = ssub.s32 512, 512
      %19 = vsyncadd [#allocation3], %s18
      %s20 = sshll.u32 [#allocation2], 4
      %s21 = int_to_ptr.vmem [resolvable:$true] %s20
      %26 = dma.hbm_to_vmem [thread:$0]  %s2, 512, %s21, [#allocation3], 128, 128, 8
    $region13: #{tpu_custom_call.1} parent=1 // pred_fallthru
      _
    // Predicated region
    $region14: #{tpu_custom_call.1} parent=1 // pred_check
      _
    $region15: #{tpu_custom_call.1} parent=1 // pred_check_branch
      %28 = sbr.rel (0) target = $region17
    $region16: #{tpu_custom_call.1} parent=1 // pred_region
      _
    $region17: #{tpu_custom_call.1} parent=1 // pred_fallthru
      _
    // Predicated region
    $region18: #{tpu_custom_call.1} parent=1 // pred_check
      _
    $region19: #{tpu_custom_call.1} parent=1 // pred_check_branch
      %30 = sbr.rel (0) target = $region21
    $region20: #{tpu_custom_call.1} parent=1 // pred_region
      %31 = dma.done [#allocation3], 512
    $region21: #{tpu_custom_call.1} parent=1 // pred_fallthru
      _
    %v32 = vld [vmem:[%s0] sm:$0xff]
    %v33 = vld [vmem:[%s1] sm:$0xff]
    %v34 = vlaneseq
    %v35 = vand.u32 %v34, 127
    %36 = vset.pattern.permute.xlu0 0
    %37 = vperm.xlu0 %36, %v32
    %v38 = vpop.permute.xlu0 %37
    %vm39 = vcmp.eq.s32.totalorder %v38, %v35
    %v40 = vsel %vm39, 1, 0
    %v41 = vcvt.s32.f32 %v40
    %42 = vset.pattern.permute.xlu0 0
    %43 = vperm.xlu0 %42, %v33
    %v44 = vpop.permute.xlu0 %43
    %vm45 = vcmp.eq.s32.totalorder %v44, %v35
    %v46 = vsel %vm45, 1, 0
    %v47 = vcvt.s32.f32 %v46
    %v48 = vld [vmem:[#allocation2] sm:$0xff]
    %v49 = vld [vmem:[#allocation2 + $0x8] sm:$0xff]
    %v50 = vld [vmem:[#allocation2 + $0x10] sm:$0xff]
    %v51 = vld [vmem:[#allocation2 + $0x18] sm:$0xff]
    %v52 = vld [vmem:[%s3] sm:$0xff]
    %vm53 = vcmask 64512
    %v55 = vsel %vm53, %v47, 0
    %57 = vmatprep.subr.mxu0 0.0
    %58 = vmatpush1.msra.mxu0 %v52
    %59 = vmatprep.subr.mxu0 0.0
    %60 = vmatpush1.msra.mxu0 0.0
    %61 = vmatprep.subr.mxu0 0.0
    %62 = vmatpush1.msra.mxu0 0.0
    %63 = vmatprep.subr.mxu0 0.0
    %64 = vmatpush1.msra.mxu0 0.0
    %65 = vmatprep.subr.mxu0 0.0
    %66 = vmatpush1.msra.mxu0 0.0
    %67 = vmatprep.subr.mxu0 0.0
    %68 = vmatpush1.msra.mxu0 0.0
    %69 = vmatprep.subr.mxu0 0.0
    %70 = vmatpush1.msra.mxu0 0.0
    %71 = vmatprep.subr.mxu0 0.0
    %72 = vmatpush1.msra.mxu0 0.0
    %73 = vmatprep.subr.mxu0 0.0
    %74 = vmatpush1.msra.mxu0 0.0
    %75 = vmatprep.subr.mxu0 0.0
    %76 = vmatpush1.msra.mxu0 0.0
    %77 = vmatprep.subr.mxu0 0.0
    %78 = vmatpush1.msra.mxu0 0.0
    %79 = vmatprep.subr.mxu0 0.0
    %80 = vmatpush1.msra.mxu0 0.0
    %81 = vmatprep.subr.mxu0 0.0
    %82 = vmatpush1.msra.mxu0 0.0
    %83 = vmatprep.subr.mxu0 0.0
    %84 = vmatpush1.msra.mxu0 0.0
    %85 = vmatprep.subr.mxu0 0.0
    %86 = vmatpush1.msra.mxu0 0.0
    %87 = vmatprep.subr.mxu0 0.0
    %88 = vmatpush1.msra.mxu0 0.0
    %89 = vmatprep.subr.mxu0 0.0
    %90 = vmatpush1.msra.mxu0 0.0
    %91 = vmatprep.subr.mxu0 0.0
    %92 = vmatpush1.msra.mxu0 0.0
    %93 = vmatprep.subr.mxu0 0.0
    %94 = vmatpush1.msra.mxu0 0.0
    %95 = vmatprep.subr.mxu0 0.0
    %96 = vmatpush1.msra.mxu0 0.0
    %97 = vmatprep.subr.mxu0 0.0
    %98 = vmatpush1.msra.mxu0 0.0
    %99 = vmatprep.subr.mxu0 0.0
    %100 = vmatpush1.msra.mxu0 0.0
    %101 = vmatprep.subr.mxu0 0.0
    %102 = vmatpush1.msra.mxu0 0.0
    %103 = vmatprep.subr.mxu0 0.0
    %104 = vmatpush1.msra.mxu0 0.0
    %105 = vmatprep.subr.mxu0 0.0
    %106 = vmatpush1.msra.mxu0 0.0
    %107 = vmatprep.subr.mxu0 0.0
    %108 = vmatpush1.msra.mxu0 0.0
    %109 = vmatprep.subr.mxu0 0.0
    %110 = vmatpush1.msra.mxu0 0.0
    %111 = vmatprep.subr.mxu0 0.0
    %112 = vmatpush1.msra.mxu0 0.0
    %113 = vmatprep.subr.mxu0 0.0
    %114 = vmatpush1.msra.mxu0 0.0
    %115 = vmatprep.subr.mxu0 0.0
    %116 = vmatpush1.msra.mxu0 0.0
    %117 = vmatprep.subr.mxu0 0.0
    %118 = vmatpush1.msra.mxu0 0.0
    %119 = vmatprep.subr.mxu0 0.0
    %120 = vmatpush1.msra.mxu0 0.0
    %121 = vmatprep.mubr.f32.mxu0 0.0
    %122 = vmatmul.mubr.f32.gmra.mrb[0].mxu0 %v55
    %v123 = vpop.f32.mrb[0].mxu0
    %v124 = vadd.f32 0.0, %v123
    %v125 = vpop.f32.mrb[0].mxu0
    %126 = vdwg.mxu0
    %vm127 = vcmask 261120
    %v129 = vsel %vm127, %v41, 0
    %131 = vmatprep.subr.mxu0 0.0
    %132 = vmatpush1.msra.mxu0 %v48
    %133 = vmatprep.subr.mxu0 0.0
    %134 = vmatpush1.msra.mxu0 %v49
    %135 = vmatprep.subr.mxu0 0.0
    %136 = vmatpush1.msra.mxu0 %v50
    %137 = vmatprep.subr.mxu0 0.0
    %138 = vmatpush1.msra.mxu0 %v51
    %139 = vmatprep.subr.mxu0 0.0
    %140 = vmatpush1.msra.mxu0 0.0
    %141 = vmatprep.subr.mxu0 0.0
    %142 = vmatpush1.msra.mxu0 0.0
    %143 = vmatprep.subr.mxu0 0.0
    %144 = vmatpush1.msra.mxu0 0.0
    %145 = vmatprep.subr.mxu0 0.0
    %146 = vmatpush1.msra.mxu0 0.0
    %147 = vmatprep.subr.mxu0 0.0
    %148 = vmatpush1.msra.mxu0 0.0
    %149 = vmatprep.subr.mxu0 0.0
    %150 = vmatpush1.msra.mxu0 0.0
    %151 = vmatprep.subr.mxu0 0.0
    %152 = vmatpush1.msra.mxu0 0.0
    %153 = vmatprep.subr.mxu0 0.0
    %154 = vmatpush1.msra.mxu0 0.0
    %155 = vmatprep.subr.mxu0 0.0
    %156 = vmatpush1.msra.mxu0 0.0
    %157 = vmatprep.subr.mxu0 0.0
    %158 = vmatpush1.msra.mxu0 0.0
    %159 = vmatprep.subr.mxu0 0.0
    %160 = vmatpush1.msra.mxu0 0.0
    %161 = vmatprep.subr.mxu0 0.0
    %162 = vmatpush1.msra.mxu0 0.0
    %163 = vmatprep.subr.mxu0 0.0
    %164 = vmatpush1.msra.mxu0 0.0
    %165 = vmatprep.subr.mxu0 0.0
    %166 = vmatpush1.msra.mxu0 0.0
    %167 = vmatprep.subr.mxu0 0.0
    %168 = vmatpush1.msra.mxu0 0.0
    %169 = vmatprep.subr.mxu0 0.0
    %170 = vmatpush1.msra.mxu0 0.0
    %171 = vmatprep.subr.mxu0 0.0
    %172 = vmatpush1.msra.mxu0 0.0
    %173 = vmatprep.subr.mxu0 0.0
    %174 = vmatpush1.msra.mxu0 0.0
    %175 = vmatprep.subr.mxu0 0.0
    %176 = vmatpush1.msra.mxu0 0.0
    %177 = vmatprep.subr.mxu0 0.0
    %178 = vmatpush1.msra.mxu0 0.0
    %179 = vmatprep.subr.mxu0 0.0
    %180 = vmatpush1.msra.mxu0 0.0
    %181 = vmatprep.subr.mxu0 0.0
    %182 = vmatpush1.msra.mxu0 0.0
    %183 = vmatprep.subr.mxu0 0.0
    %184 = vmatpush1.msra.mxu0 0.0
    %185 = vmatprep.subr.mxu0 0.0
    %186 = vmatpush1.msra.mxu0 0.0
    %187 = vmatprep.subr.mxu0 0.0
    %188 = vmatpush1.msra.mxu0 0.0
    %189 = vmatprep.subr.mxu0 0.0
    %190 = vmatpush1.msra.mxu0 0.0
    %191 = vmatprep.subr.mxu0 0.0
    %192 = vmatpush1.msra.mxu0 0.0
    %193 = vmatprep.subr.mxu0 0.0
    %194 = vmatpush1.msra.mxu0 0.0
    %195 = vmatprep.mubr.f32.mxu0 0.0
    %196 = vmatmul.mubr.f32.gmra.mrb[0].mxu0 %v129
    %v197 = vpop.f32.mrb[0].mxu0
    %v198 = vadd.f32 %v124, %v197
    %v199 = vpop.f32.mrb[0].mxu0
    %200 = vdwg.mxu0
    %201 = vst [vmem:[#allocation5] sm:$0xff] %v198
    // Predicated region
    $region22: #{tpu_custom_call.1} parent=1 // pred_check
      _
    $region23: #{tpu_custom_call.1} parent=1 // pred_check_branch
      %203 = sbr.rel (0) target = $region25
    $region24: #{tpu_custom_call.1} parent=1 // pred_region
      %s205 = ssub.s32 128, 128
      %206 = vsyncadd [#allocation4], %s205
      %s208 = sshll.u32 [#allocation5], 4
      %s209 = int_to_ptr.vmem [resolvable:$true] %s208
      %211 = dma.vmem_to_hbm [thread:$0]  %s209, 128, %s4, [#allocation4]
    $region25: #{tpu_custom_call.1} parent=1 // pred_fallthru
      _
    // Predicated region
    $region26: #{tpu_custom_call.1} parent=1 // pred_check
      _
    $region27: #{tpu_custom_call.1} parent=1 // pred_check_branch
      %213 = sbr.rel (0) target = $region29
    $region28: #{tpu_custom_call.1} parent=1 // pred_region
      %214 = dma.done [#allocation4], 128
    $region29: #{tpu_custom_call.1} parent=1 // pred_fallthru
      _
    %215 = vsyncpa [#allocation3], 1
    %216 = vsyncpa [#allocation4], 1

</llo_original>
